<compile_context>
chip_gen: v5e
topology: v5e:2x2
jax: 0.10.0
libtpu: 0.0.40
codegen_flags: <defaults>
</compile_context>

<pallas_src>
import math
from functools import partial

import jax
import jax.numpy as jnp
from jax.experimental import pallas as pl
from jax.experimental.pallas import tpu as pltpu


# ----------------------------- shared math helpers ----------------------------

def _layernorm(x, gamma, beta, eps=1e-12):
    mu = jnp.mean(x, axis=-1, keepdims=True)
    var = jnp.mean((x - mu) ** 2, axis=-1, keepdims=True)
    return (x - mu) * jax.lax.rsqrt(var + eps) * gamma + beta


def _erf(x):
    # Abramowitz & Stegun 7.1.26 polynomial erf (abs err ~1.5e-7); exp-only so it
    # lowers cleanly in Mosaic. Matches HF BERT's exact erf GELU to float precision.
    a1, a2, a3, a4, a5 = 0.254829592, -0.284496736, 1.421413741, -1.453152027, 1.061405429
    p = 0.3275911
    sign = jnp.where(x >= 0.0, 1.0, -1.0)
    ax = jnp.abs(x)
    t = 1.0 / (1.0 + p * ax)
    poly = ((((a5 * t + a4) * t + a3) * t + a2) * t + a1) * t
    return sign * (1.0 - poly * jnp.exp(-ax * ax))


def _gelu(x):
    return 0.5 * x * (1.0 + _erf(x * (1.0 / math.sqrt(2.0))))


# ------------------------------- Pallas kernels --------------------------------

def embed_ln_kernel(we_ref, te_ref, pe_ref, g_ref, b_ref, out_ref):
    x = we_ref[0] + te_ref[0] + pe_ref[...]
    out_ref[0] = _layernorm(x, g_ref[...], b_ref[...])


def bert_layer_kernel(x_ref, mask_ref,
                      wqkv_ref, bqkv_ref, wo_ref, bo_ref,
                      ln1g_ref, ln1b_ref,
                      wi_ref, bi_ref, wf_ref, bf_ref,
                      ln2g_ref, ln2b_ref,
                      out_ref, ctx_ref, *, num_heads, head_dim):
    x = x_ref[0]                      # (S, H) f32 activations
    m = mask_ref[0]                   # (1, S) additive mask
    H = num_heads * head_dim
    scale = 1.0 / math.sqrt(head_dim)
    bf16 = jnp.bfloat16

    xb = x.astype(bf16)

    # ---- fused QKV projection: single wide MXU matmul, bf16 in / f32 accumulate ----
    qkv = jnp.dot(xb, wqkv_ref[...], preferred_element_type=jnp.float32) + bqkv_ref[...]

    # ---- per-head attention; contexts written into one (S, H) VMEM buffer so the
    #      output projection is a single full-rank matmul. (num_heads is small here;
    #      per-iteration temporaries die each iteration.) ----
    for h in range(num_heads):
        lo = h * head_dim
        q = qkv[:, lo:lo + head_dim].astype(bf16)
        k = qkv[:, H + lo:H + lo + head_dim].astype(bf16)
        v = qkv[:, 2 * H + lo:2 * H + lo + head_dim].astype(bf16)
        s = jax.lax.dot_general(q, k, (((1,), (1,)), ((), ())),
                                preferred_element_type=jnp.float32) * scale + m
        s = s - jnp.max(s, axis=-1, keepdims=True)
        p = jnp.exp(s)
        p = p * pl.reciprocal(jnp.sum(p, axis=-1, keepdims=True), approx=True)
        ctx_ref[:, lo:lo + head_dim] = jnp.dot(p.astype(bf16), v,
                                               preferred_element_type=jnp.float32)

    # ---- fused output projection (one (S,H)@(H,H) matmul) + residual + LN ----
    attn = jnp.dot(ctx_ref[...].astype(bf16), wo_ref[...],
                   preferred_element_type=jnp.float32) + bo_ref[...]
    x1 = _layernorm(x + attn, ln1g_ref[...], ln1b_ref[...])

    # ---- feed-forward (bf16 matmuls, f32 pointwise) ----
    hdn = jnp.dot(x1.astype(bf16), wi_ref[...],
                  preferred_element_type=jnp.float32) + bi_ref[...]
    hdn = _gelu(hdn)
    ffn = jnp.dot(hdn.astype(bf16), wf_ref[...],
                  preferred_element_type=jnp.float32) + bf_ref[...]
    out_ref[0] = _layernorm(x1 + ffn, ln2g_ref[...], ln2b_ref[...])


# --------------------------------- wrappers ------------------------------------

def _const_spec(shape):
    n = len(shape)
    return pl.BlockSpec(shape, lambda b, _n=n: (0,) * _n)


def embed_layernorm(word_e, type_e, pos_e, g, b):
    B, S, H = word_e.shape
    return pl.pallas_call(
        embed_ln_kernel,
        out_shape=jax.ShapeDtypeStruct((B, S, H), jnp.float32),
        grid=(B,),
        in_specs=[pl.BlockSpec((1, S, H), lambda i: (i, 0, 0)),
                  pl.BlockSpec((1, S, H), lambda i: (i, 0, 0)),
                  _const_spec((S, H)),
                  _const_spec((1, H)),
                  _const_spec((1, H))],
        out_specs=pl.BlockSpec((1, S, H), lambda i: (i, 0, 0)),
        compiler_params=pltpu.CompilerParams(dimension_semantics=("parallel",)),
    )(word_e, type_e, pos_e, g, b)


def bert_layer(x, mask_add, lp, num_heads, head_dim):
    B, S, H = x.shape
    I = lp["wi"].shape[-1]
    kernel = partial(bert_layer_kernel, num_heads=num_heads, head_dim=head_dim)

    in_specs = [
        pl.BlockSpec((1, S, H), lambda b: (b, 0, 0)),   # x
        pl.BlockSpec((1, 1, S), lambda b: (b, 0, 0)),   # additive mask
        _const_spec((H, 3 * H)), _const_spec((1, 3 * H)),   # fused Wqkv, bqkv
        _const_spec((H, H)), _const_spec((1, H)),            # Wo, bo
        _const_spec((1, H)), _const_spec((1, H)),             # ln1
        _const_spec((H, I)), _const_spec((1, I)),             # Wi, bi
        _const_spec((I, H)), _const_spec((1, H)),             # Wf, bf
        _const_spec((1, H)), _const_spec((1, H)),             # ln2
    ]
    return pl.pallas_call(
        kernel,
        out_shape=jax.ShapeDtypeStruct((B, S, H), jnp.float32),
        grid=(B,),
        in_specs=in_specs,
        out_specs=pl.BlockSpec((1, S, H), lambda b: (b, 0, 0)),
        scratch_shapes=[pltpu.VMEM((S, H), jnp.float32)],   # per-head context buffer
        compiler_params=pltpu.CompilerParams(
            dimension_semantics=("parallel",),
            vmem_limit_bytes=64 * 1024 * 1024),
    )(x, mask_add,
      lp["wqkv"], lp["bqkv"], lp["wo"], lp["bo"],
      lp["ln1_g"], lp["ln1_b"],
      lp["wi"], lp["bi"], lp["wf"], lp["bf"],
      lp["ln2_g"], lp["ln2_b"])


def transformer_classifier_forward(input_ids, attention_mask, token_type_ids,
                                   params, num_heads, head_dim):
    B, S = input_ids.shape
    # Embedding gathers are data-dependent gathers -> XLA glue; LN + encoder are Pallas.
    word_e = jnp.take(params["word_emb"], input_ids, axis=0)
    type_e = jnp.take(params["type_emb"], token_type_ids, axis=0)
    pos_e = params["pos_emb"][:S, :]
    x = embed_layernorm(word_e, type_e, pos_e, params["emb_ln_g"], params["emb_ln_b"])

    mask_add = ((1.0 - attention_mask.astype(jnp.float32)) * -10000.0)[:, None, :]
    for lp in params["layers"]:
        x = bert_layer(x, mask_add, lp, num_heads, head_dim)

    cls = x[:, 0, :]                     # last_hidden_state[:, 0]
    # nn.Dropout is identity at inference time.
    # Classifier (H -> 2): lane width 2 makes a Pallas kernel pure overhead; use XLA.
    logits = jnp.dot(cls, params["cls_w"], preferred_element_type=jnp.float32) \
        + params["cls_b"]
    return logits


# ------------------------------ parameter init ---------------------------------

def init_params(key, vocab, hidden, layers, heads, intermediate, max_pos, type_vocab=2):
    keys = iter(jax.random.split(key, 256))
    nrm = lambda shape: 0.02 * jax.random.normal(next(keys), shape, jnp.float32)
    ones = lambda shape: jnp.ones(shape, jnp.float32)
    zeros = lambda shape: jnp.zeros(shape, jnp.float32)
    bf16 = jnp.bfloat16
    params = {
        "word_emb": nrm((vocab, hidden)),
        "pos_emb": nrm((max_pos, hidden)),
        "type_emb": nrm((type_vocab, hidden)),
        "emb_ln_g": ones((1, hidden)), "emb_ln_b": zeros((1, hidden)),
        "cls_w": nrm((hidden, 2)), "cls_b": zeros((1, 2)),
        "layers": [],
    }
    for _ in range(layers):
        params["layers"].append({
            # fused [Wq | Wk | Wv] stored (H, 3H), bf16 in HBM (halved DMA volume)
            "wqkv": nrm((hidden, 3 * hidden)).astype(bf16),
            "bqkv": zeros((1, 3 * hidden)),
            "wo": nrm((hidden, hidden)).astype(bf16), "bo": zeros((1, hidden)),
            "ln1_g": ones((1, hidden)), "ln1_b": zeros((1, hidden)),
            "wi": nrm((hidden, intermediate)).astype(bf16), "bi": zeros((1, intermediate)),
            "wf": nrm((intermediate, hidden)).astype(bf16), "bf": zeros((1, hidden)),
            "ln2_g": ones((1, hidden)), "ln2_b": zeros((1, hidden)),
        })
    return params


# ------------------------------ pure-JAX reference ------------------------------
# Mirrors the kernel's numerics (bf16 matmul operands, f32 accumulation, f32
# pointwise math, exact-erf GELU) so the parity check is tight.

def reference_forward(input_ids, attention_mask, token_type_ids, params, heads, hd):
    bf16 = jnp.bfloat16
    H = heads * hd
    S = input_ids.shape[1]

    def mm(a, w):   # (..., K) @ (K, N), bf16 operands, f32 accumulate
        return jax.lax.dot_general(a.astype(bf16), w.astype(bf16),
                                   (((a.ndim - 1,), (0,)), ((), ())),
                                   preferred_element_type=jnp.float32)

    emb = (jnp.take(params["word_emb"], input_ids, axis=0)
           + params["pos_emb"][None, :S, :]
           + jnp.take(params["type_emb"], token_type_ids, axis=0))
    x = _layernorm(emb, params["emb_ln_g"], params["emb_ln_b"])
    madd = ((1.0 - attention_mask.astype(jnp.float32)) * -10000.0)[:, None, :]
    scale = 1.0 / math.sqrt(hd)

    for lp in params["layers"]:
        qkv = mm(x, lp["wqkv"]) + lp["bqkv"]          # (B, S, 3H)
        ctx_parts = []
        for h in range(heads):
            lo = h * hd
            q = qkv[..., lo:lo + hd]
            k = qkv[..., H + lo:H + lo + hd]
            v = qkv[..., 2 * H + lo:2 * H + lo + hd]
            s = jnp.einsum("bqd,bkd->bqk", q.astype(bf16), k.astype(bf16),
                           preferred_element_type=jnp.float32) * scale + madd
            p = jax.nn.softmax(s, axis=-1)
            ctx_parts.append(jnp.einsum("bqk,bkd->bqd", p.astype(bf16), v.astype(bf16),
                                        preferred_element_type=jnp.float32))
        ctx = jnp.concatenate(ctx_parts, axis=-1)     # (B, S, H)
        attn = mm(ctx, lp["wo"]) + lp["bo"]
        x1 = _layernorm(x + attn, lp["ln1_g"], lp["ln1_b"])
        f = _gelu(mm(x1, lp["wi"]) + lp["bi"])
        f = mm(f, lp["wf"]) + lp["bf"]
        x = _layernorm(x1 + f, lp["ln2_g"], lp["ln2_b"])

    cls = x[:, 0, :]
    return jnp.dot(cls, params["cls_w"], preferred_element_type=jnp.float32) \
        + params["cls_b"]


# ------------------------------------ main --------------------------------------

if __name__ == "__main__":
    B, S = 2, 8
    VOCAB, HIDDEN, LAYERS, HEADS, INTER, MAXPOS = 100, 32, 2, 2, 64, 16
    HD = HIDDEN // HEADS

    key = jax.random.PRNGKey(0)
    pkey, ikey = jax.random.split(key)
    params = init_params(pkey, VOCAB, HIDDEN, LAYERS, HEADS, INTER, MAXPOS)

    input_ids = jax.random.randint(ikey, (B, S), 0, VOCAB, dtype=jnp.int32)
    attention_mask = jnp.array([[1, 1, 1, 1, 1, 1, 1, 1],
                                [1, 1, 1, 1, 1, 1, 0, 0]], dtype=jnp.int32)
    token_type_ids = jnp.zeros((B, S), dtype=jnp.int32)

    logits = transformer_classifier_forward(
        input_ids, attention_mask, token_type_ids, params, HEADS, HD)
    logits = jax.block_until_ready(logits)
    assert logits.shape == (B, 2) and logits.dtype == jnp.float32

    ref = reference_forward(input_ids, attention_mask, token_type_ids, params, HEADS, HD)
    err = float(jnp.max(jnp.abs(logits - ref)))
    assert err < 1e-2, f"mismatch vs reference: {err}"

    print("KERNEL_OK")
</pallas_src>

<mosaic_0001>
module attributes {stable_mosaic.version = 11 : i64} {
  func.func @embed_ln_kernel(%arg0: i32, %arg1: memref<1x8x32xf32, #tpu.memory_space<vmem>>, %arg2: memref<1x8x32xf32, #tpu.memory_space<vmem>>, %arg3: memref<8x32xf32, #tpu.memory_space<vmem>>, %arg4: memref<1x32xf32, #tpu.memory_space<vmem>>, %arg5: memref<1x32xf32, #tpu.memory_space<vmem>>, %arg6: memref<1x8x32xf32, #tpu.memory_space<vmem>>) attributes {dimension_semantics = [#tpu.dimension_semantics<parallel>], iteration_bounds = array<i64: 2>, scalar_prefetch = 0 : i64, scratch_operands = 0 : i64, tpu.core_type = #tpu.core_type<tc>, window_params = [{transform_indices = @transform_0, window_bounds = array<i64: 1, 8, 32>}, {transform_indices = @transform_1, window_bounds = array<i64: 1, 8, 32>}, {pipeline_mode = #tpu.pipeline_mode<synchronous>, transform_indices = @transform_2, window_bounds = array<i64: 8, 32>}, {pipeline_mode = #tpu.pipeline_mode<synchronous>, transform_indices = @transform_3, window_bounds = array<i64: 1, 32>}, {pipeline_mode = #tpu.pipeline_mode<synchronous>, transform_indices = @transform_4, window_bounds = array<i64: 1, 32>}, {transform_indices = @transform_5, window_bounds = array<i64: 1, 8, 32>}]} {
    %c0 = arith.constant 0 : index
    %c0_0 = arith.constant 0 : index
    %c0_1 = arith.constant 0 : index
    %0 = vector.load %arg1[%c0, %c0_0, %c0_1] : memref<1x8x32xf32, #tpu.memory_space<vmem>>, vector<1x8x32xf32>
    %1 = vector.shape_cast %0 : vector<1x8x32xf32> to vector<8x32xf32>
    %c0_2 = arith.constant 0 : index
    %c0_3 = arith.constant 0 : index
    %c0_4 = arith.constant 0 : index
    %2 = vector.load %arg2[%c0_2, %c0_3, %c0_4] : memref<1x8x32xf32, #tpu.memory_space<vmem>>, vector<1x8x32xf32>
    %3 = vector.shape_cast %2 : vector<1x8x32xf32> to vector<8x32xf32>
    %4 = arith.addf %1, %3 : vector<8x32xf32>
    %c0_5 = arith.constant 0 : index
    %c0_6 = arith.constant 0 : index
    %5 = vector.load %arg3[%c0_5, %c0_6] : memref<8x32xf32, #tpu.memory_space<vmem>>, vector<8x32xf32>
    %6 = arith.addf %4, %5 : vector<8x32xf32>
    %c0_7 = arith.constant 0 : index
    %c0_8 = arith.constant 0 : index
    %7 = vector.load %arg4[%c0_7, %c0_8] : memref<1x32xf32, #tpu.memory_space<vmem>>, vector<1x32xf32>
    %c0_9 = arith.constant 0 : index
    %c0_10 = arith.constant 0 : index
    %8 = vector.load %arg5[%c0_9, %c0_10] : memref<1x32xf32, #tpu.memory_space<vmem>>, vector<1x32xf32>
    %cst = arith.constant dense<0.000000e+00> : vector<8xf32>
    %9 = vector.multi_reduction <add>, %6, %cst [1] : vector<8x32xf32> to vector<8xf32>
    %10 = vector.shape_cast %9 : vector<8xf32> to vector<8x1xf32>
    %cst_11 = arith.constant 3.200000e+01 : f32
    %11 = vector.broadcast %cst_11 : f32 to vector<8x1xf32>
    %12 = arith.divf %10, %11 : vector<8x1xf32>
    %13 = vector.broadcast %12 : vector<8x1xf32> to vector<8x32xf32>
    %14 = arith.subf %6, %13 : vector<8x32xf32>
    %15 = arith.mulf %14, %14 : vector<8x32xf32>
    %cst_12 = arith.constant dense<0.000000e+00> : vector<8xf32>
    %16 = vector.multi_reduction <add>, %15, %cst_12 [1] : vector<8x32xf32> to vector<8xf32>
    %17 = vector.shape_cast %16 : vector<8xf32> to vector<8x1xf32>
    %cst_13 = arith.constant 3.200000e+01 : f32
    %18 = vector.broadcast %cst_13 : f32 to vector<8x1xf32>
    %19 = arith.divf %17, %18 : vector<8x1xf32>
    %20 = vector.broadcast %12 : vector<8x1xf32> to vector<8x32xf32>
    %21 = arith.subf %6, %20 : vector<8x32xf32>
    %cst_14 = arith.constant 9.99999996E-13 : f32
    %22 = vector.broadcast %cst_14 : f32 to vector<8x1xf32>
    %23 = arith.addf %19, %22 : vector<8x1xf32>
    %24 = math.rsqrt %23 : vector<8x1xf32>
    %25 = vector.broadcast %24 : vector<8x1xf32> to vector<8x32xf32>
    %26 = arith.mulf %21, %25 : vector<8x32xf32>
    %27 = vector.broadcast %7 : vector<1x32xf32> to vector<8x32xf32>
    %28 = arith.mulf %26, %27 : vector<8x32xf32>
    %29 = vector.broadcast %8 : vector<1x32xf32> to vector<8x32xf32>
    %30 = arith.addf %28, %29 : vector<8x32xf32>
    %c0_15 = arith.constant 0 : index
    %c0_16 = arith.constant 0 : index
    %c0_17 = arith.constant 0 : index
    %31 = vector.load %arg6[%c0_15, %c0_16, %c0_17] : memref<1x8x32xf32, #tpu.memory_space<vmem>>, vector<1x8x32xf32>
    %32 = vector.shape_cast %31 : vector<1x8x32xf32> to vector<8x32xf32>
    %33 = vector.shape_cast %30 : vector<8x32xf32> to vector<1x8x32xf32>
    tpu.vector_store %arg6[%c0_15, %c0_16, %c0_17], %33 {strides = array<i32>} : memref<1x8x32xf32, #tpu.memory_space<vmem>>, vector<1x8x32xf32>,
    return
  }
  func.func @transform_0(%arg0: i32) -> (i32, i32, i32) {
    %c0_i32 = arith.constant 0 : i32
    %c0_i32_0 = arith.constant 0 : i32
    %c0_i32_1 = arith.constant 0 : i32
    return %arg0, %c0_i32, %c0_i32_0 : i32, i32, i32
  }
  func.func @transform_1(%arg0: i32) -> (i32, i32, i32) {
    %c0_i32 = arith.constant 0 : i32
    %c0_i32_0 = arith.constant 0 : i32
    %c0_i32_1 = arith.constant 0 : i32
    return %arg0, %c0_i32, %c0_i32_0 : i32, i32, i32
  }
  func.func @transform_2(%arg0: i32) -> (i32, i32) {
    %c0_i32 = arith.constant 0 : i32
    %c0_i32_0 = arith.constant 0 : i32
    %c0_i32_1 = arith.constant 0 : i32
    return %c0_i32, %c0_i32_0 : i32, i32
  }
  func.func @transform_3(%arg0: i32) -> (i32, i32) {
    %c0_i32 = arith.constant 0 : i32
    %c0_i32_0 = arith.constant 0 : i32
    %c0_i32_1 = arith.constant 0 : i32
    return %c0_i32, %c0_i32_0 : i32, i32
  }
  func.func @transform_4(%arg0: i32) -> (i32, i32) {
    %c0_i32 = arith.constant 0 : i32
    %c0_i32_0 = arith.constant 0 : i32
    %c0_i32_1 = arith.constant 0 : i32
    return %c0_i32, %c0_i32_0 : i32, i32
  }
  func.func @transform_5(%arg0: i32) -> (i32, i32, i32) {
    %c0_i32 = arith.constant 0 : i32
    %c0_i32_0 = arith.constant 0 : i32
    %c0_i32_1 = arith.constant 0 : i32
    return %arg0, %c0_i32, %c0_i32_0 : i32, i32, i32
  }
}

</mosaic_0001>

<llo_original>
// kernel: tpu_custom_call.1
$region0: #{tpu_custom_call.1}
  #allocation0 [shape = 'u32[]', space=smem, size = 0x4, offset = 0x4, fixed_abs, tag = 'smem constant byte address 0x4 - core index']
  #allocation1 [shape = 'u32[72,128]{1,0:T(1,128)}', space=vmem, size = 0x9000, scoped, tag = 'internal scratch']
  %s0 = inlined_call_operand.hbm [shape: f32[2,8,32], index: 0, kind: input, shape index: {}]
  %s1 = inlined_call_operand.hbm [shape: f32[2,8,32], index: 1, kind: input, shape index: {}]
  %s2 = inlined_call_operand.hbm [shape: f32[8,32], index: 2, kind: input, shape index: {}]
  %s3 = inlined_call_operand.vmem [shape: f32[1,32], index: 3, kind: input, shape index: {}]
  %s4 = inlined_call_operand.vmem [shape: f32[1,32], index: 4, kind: input, shape index: {}]
  %s5 = inlined_call_operand.hbm [shape: f32[2,8,32], index: 5, kind: output, shape index: {}]
  %s6 = sld [smem:[#allocation0]]
  $region65: #{tpu_custom_call.1} parent=0
    _
  %s8 = ssub.s32 1, %s6
  %s9 = scalar_select 0, %s8, %s6
  $region1: #{tpu_custom_call.1} parent=0
    #allocation2 [shape = 'u8[8192]{0}', space=vmem, size = 0x2000, scoped, tag = 'input window, operand 0']
    #allocation3 [shape = 's32[2]{0}', space=sflag, size = 0x8, scoped, tag = 'scoped memory for tpu_custom_call.1']
    #allocation4 [shape = 's32[2]{0}', space=sflag, size = 0x8, scoped, tag = 'scoped memory for tpu_custom_call.1']
    #allocation5 [shape = 'u8[8192]{0}', space=vmem, size = 0x2000, scoped, tag = 'input window, operand 1']
    #allocation6 [shape = 's32[2]{0}', space=sflag, size = 0x8, scoped, tag = 'scoped memory for tpu_custom_call.1']
    #allocation7 [shape = 'u8[4096]{0}', space=vmem, size = 0x1000, scoped, tag = 'input window, operand 2, single buffered']
    #allocation8 [shape = 'u8[8192]{0}', space=vmem, size = 0x2000, scoped, tag = 'output window, operand 0']
    %10 = vsyncpa [#allocation3], 0
    %s11 = scalar_lea.sflag [#allocation3], 1
    %12 = vsyncpa %s11, 0
    %13 = vsyncpa [#allocation6], 0
    %s14 = scalar_lea.sflag [#allocation6], 1
    %15 = vsyncpa %s14, 0
    %16 = vsyncpa [#allocation4], 0
    %s17 = scalar_lea.sflag [#allocation4], 1
    %18 = vsyncpa %s17, 0
    loop: start=0, step=1, limit=4
    $region2: #{tpu_custom_call.1} parent=1 // loop_pre_header
      _
    $region3: #{tpu_custom_call.1} parent=1 // loop_header
      %s20 = sphi 0, %s24
      %p21 = scmp.ge.s32.totalorder %s20, 4
      %s30 = sphi 0, %s32
      %s33 = sphi 0, %s30
      %s34 = sphi 0, %s33
      %s50 = sphi 0, %s34
      %s56 = sphi 0, %s58
      %s59 = sphi 0, %s56
      %s60 = sphi 0, %s59
      %s76 = sphi 0, %s60
      %s80 = sphi 0, %s80
      %s82 = sphi 0, %s80
      %s83 = sphi 0, %s82
      %s97 = sphi 0, %s83
      %s101 = sphi 0, %s101
      %s103 = sphi 0, %s101
      %s104 = sphi 0, %s103
      %s118 = sphi 0, %s104
      %s122 = sphi 0, %s122
      %s124 = sphi 0, %s122
      %s125 = sphi 0, %s124
      %s139 = sphi 0, %s125
      %s145 = sphi 0, %s147
      %s148 = sphi 0, %s145
      %s149 = sphi 0, %s148
      %s165 = sphi 0, %s149
    $region4: #{tpu_custom_call.1} parent=1 // loop_header_branch
      %23 = sbr.rel (%p21) target = $region8
    $region5: #{tpu_custom_call.1} parent=1 // loop_body
      %s25 = ssub.s32 %s20, 1
      %s26 = ssub.s32 %s20, 2
      %s27 = sadd.s32 %s20, 1
      %s28 = ssub.s32 %s20, %s27
      %p29 = scmp.eq.s32.totalorder %s28, 0
      %s31 = sadd.s32 %s30, 1
      %s32 = scalar_select %p29, %s30, %s31
      %p35 = pneg %p29
      %p36 = scmp.eq.s32.totalorder %s20, 1
      %p37 = por %p35, %p36
      %p38 = scmp.ne.s32.totalorder %s30, %s33
      %p39 = scmp.eq.s32.totalorder %s20, 0
      %p40 = por %p38, %p39
      %p41 = scmp.ne.s32.totalorder %s30, %s33
      %p42 = scmp.eq.s32.totalorder %s25, 1
      %p43 = por %p41, %p42
      %p44 = scmp.ne.s32.totalorder %s33, %s34
      %p45 = scmp.eq.s32.totalorder %s25, 0
      %p46 = por %p44, %p45
      %p47 = scmp.ne.s32.totalorder %s33, %s34
      %p48 = scmp.eq.s32.totalorder %s26, 1
      %p49 = por %p47, %p48
      %p51 = scmp.ne.s32.totalorder %s34, %s50
      %p52 = scmp.eq.s32.totalorder %s26, 0
      %p53 = por %p51, %p52
      %s54 = ssub.s32 %s20, %s27
      %p55 = scmp.eq.s32.totalorder %s54, 0
      %s57 = sadd.s32 %s56, 1
      %s58 = scalar_select %p55, %s56, %s57
      %p61 = pneg %p55
      %p62 = scmp.eq.s32.totalorder %s20, 1
      %p63 = por %p61, %p62
      %p64 = scmp.ne.s32.totalorder %s56, %s59
      %p65 = scmp.eq.s32.totalorder %s20, 0
      %p66 = por %p64, %p65
      %p67 = scmp.ne.s32.totalorder %s56, %s59
      %p68 = scmp.eq.s32.totalorder %s25, 1
      %p69 = por %p67, %p68
      %p70 = scmp.ne.s32.totalorder %s59, %s60
      %p71 = scmp.eq.s32.totalorder %s25, 0
      %p72 = por %p70, %p71
      %p73 = scmp.ne.s32.totalorder %s59, %s60
      %p74 = scmp.eq.s32.totalorder %s26, 1
      %p75 = por %p73, %p74
      %p77 = scmp.ne.s32.totalorder %s60, %s76
      %p78 = scmp.eq.s32.totalorder %s26, 0
      %p79 = por %p77, %p78
      %s81 = sadd.s32 %s80, 1
      %p84 = scmp.eq.s32.totalorder %s20, 1
      %p85 = scmp.ne.s32.totalorder %s80, %s82
      %p86 = scmp.eq.s32.totalorder %s20, 0
      %p87 = por %p85, %p86
      %p88 = scmp.ne.s32.totalorder %s80, %s82
      %p89 = scmp.eq.s32.totalorder %s25, 1
      %p90 = por %p88, %p89
      %p91 = scmp.ne.s32.totalorder %s82, %s83
      %p92 = scmp.eq.s32.totalorder %s25, 0
      %p93 = por %p91, %p92
      %p94 = scmp.ne.s32.totalorder %s82, %s83
      %p95 = scmp.eq.s32.totalorder %s26, 1
      %p96 = por %p94, %p95
      %p98 = scmp.ne.s32.totalorder %s83, %s97
      %p99 = scmp.eq.s32.totalorder %s26, 0
      %p100 = por %p98, %p99
      %s102 = sadd.s32 %s101, 1
      %p105 = scmp.eq.s32.totalorder %s20, 1
      %p106 = scmp.ne.s32.totalorder %s101, %s103
      %p107 = scmp.eq.s32.totalorder %s20, 0
      %p108 = por %p106, %p107
      %p109 = scmp.ne.s32.totalorder %s101, %s103
      %p110 = scmp.eq.s32.totalorder %s25, 1
      %p111 = por %p109, %p110
      %p112 = scmp.ne.s32.totalorder %s103, %s104
      %p113 = scmp.eq.s32.totalorder %s25, 0
      %p114 = por %p112, %p113
      %p115 = scmp.ne.s32.totalorder %s103, %s104
      %p116 = scmp.eq.s32.totalorder %s26, 1
      %p117 = por %p115, %p116
      %p119 = scmp.ne.s32.totalorder %s104, %s118
      %p120 = scmp.eq.s32.totalorder %s26, 0
      %p121 = por %p119, %p120
      %s123 = sadd.s32 %s122, 1
      %p126 = scmp.eq.s32.totalorder %s20, 1
      %p127 = scmp.ne.s32.totalorder %s122, %s124
      %p128 = scmp.eq.s32.totalorder %s20, 0
      %p129 = por %p127, %p128
      %p130 = scmp.ne.s32.totalorder %s122, %s124
      %p131 = scmp.eq.s32.totalorder %s25, 1
      %p132 = por %p130, %p131
      %p133 = scmp.ne.s32.totalorder %s124, %s125
      %p134 = scmp.eq.s32.totalorder %s25, 0
      %p135 = por %p133, %p134
      %p136 = scmp.ne.s32.totalorder %s124, %s125
      %p137 = scmp.eq.s32.totalorder %s26, 1
      %p138 = por %p136, %p137
      %p140 = scmp.ne.s32.totalorder %s125, %s139
      %p141 = scmp.eq.s32.totalorder %s26, 0
      %p142 = por %p140, %p141
      %s143 = ssub.s32 %s20, %s27
      %p144 = scmp.eq.s32.totalorder %s143, 0
      %s146 = sadd.s32 %s145, 1
      %s147 = scalar_select %p144, %s145, %s146
      %p150 = pneg %p144
      %p151 = scmp.eq.s32.totalorder %s20, 1
      %p152 = por %p150, %p151
      %p153 = scmp.ne.s32.totalorder %s145, %s148
      %p154 = scmp.eq.s32.totalorder %s20, 0
      %p155 = por %p153, %p154
      %p156 = scmp.ne.s32.totalorder %s145, %s148
      %p157 = scmp.eq.s32.totalorder %s25, 1
      %p158 = por %p156, %p157
      %p159 = scmp.ne.s32.totalorder %s148, %s149
      %p160 = scmp.eq.s32.totalorder %s25, 0
      %p161 = por %p159, %p160
      %p162 = scmp.ne.s32.totalorder %s148, %s149
      %p163 = scmp.eq.s32.totalorder %s26, 1
      %p164 = por %p162, %p163
      %p166 = scmp.ne.s32.totalorder %s149, %s165
      %p167 = scmp.eq.s32.totalorder %s26, 0
      %p168 = por %p166, %p167
      %p169 = scmp.le.s32.totalorder 1, %s20
      %p170 = scmp.lt.s32.totalorder %s20, 3
      %p171 = pnand %p169, %p170
      %p172 = pneg %p171
      // Predicated region
      $region9: #{tpu_custom_call.1} parent=5 // pred_check
        _
      $region10: #{tpu_custom_call.1} parent=5 // pred_check_branch
        %174 = sbr.rel (%p171) target = $region12
      $region11: #{tpu_custom_call.1} parent=5 // pred_region
        %s175 = ssub.s32 %s20, 1
        // Predicated region
        $region13: #{tpu_custom_call.1} parent=11 // pred_check
          %p176 = pneg %p93
        $region14: #{tpu_custom_call.1} parent=11 // pred_check_branch
          %178 = sbr.rel (%p176) target = $region16
        $region15: #{tpu_custom_call.1} parent=11 // pred_region
          %180 = vsyncadd [#allocation6], 0
          %s182 = sshll.u32 %s2, 4
          %s183 = int_to_ptr.hbm [resolvable:$true] %s182
          %s184 = sshll.u32 [#allocation7], 4
          %s185 = int_to_ptr.vmem [resolvable:$true] %s184
          %187 = dma.hbm_to_vmem [thread:$0]  %s183, 128, %s185, [#allocation6]
        $region16: #{tpu_custom_call.1} parent=11 // pred_fallthru
          _
        // Predicated region
        $region17: #{tpu_custom_call.1} parent=11 // pred_check
          %p188 = pneg %p114
        $region18: #{tpu_custom_call.1} parent=11 // pred_check_branch
          %190 = sbr.rel (%p188) target = $region20
        $region19: #{tpu_custom_call.1} parent=11 // pred_region
          _
        $region20: #{tpu_custom_call.1} parent=11 // pred_fallthru
          _
        // Predicated region
        $region21: #{tpu_custom_call.1} parent=11 // pred_check
          %p191 = pneg %p135
        $region22: #{tpu_custom_call.1} parent=11 // pred_check_branch
          %193 = sbr.rel (%p191) target = $region24
        $region23: #{tpu_custom_call.1} parent=11 // pred_region
          _
        $region24: #{tpu_custom_call.1} parent=11 // pred_fallthru
          _
      $region12: #{tpu_custom_call.1} parent=5 // pred_fallthru
        _
      %p194 = scmp.lt.s32.totalorder %s20, 2
      // Predicated region
      $region25: #{tpu_custom_call.1} parent=5 // pred_check
        %p195 = pneg %p194
      $region26: #{tpu_custom_call.1} parent=5 // pred_check_branch
        %197 = sbr.rel (%p195) target = $region28
      $region27: #{tpu_custom_call.1} parent=5 // pred_region
        // Predicated region
        $region29: #{tpu_custom_call.1} parent=27 // pred_check
          %p198 = pneg %p40
        $region30: #{tpu_custom_call.1} parent=27 // pred_check_branch
          %200 = sbr.rel (%p198) target = $region32
        $region31: #{tpu_custom_call.1} parent=27 // pred_region
          %s201 = sand.u32 %s30, 1
          %s202 = scalar_lea.sflag [#allocation3], %s201
          %s203 = sand.u32 %s30, 1
          %s204 = smul.addr %s203, 8
          %s205 = scalar_lea.vmem [#allocation2], %s204
          %207 = vsyncadd %s202, 0
          %s208 = smul.addr %s20, 8
          %s209 = scalar_lea.hbm %s0, %s208
          %s211 = sshll.u32 %s209, 4
          %s212 = int_to_ptr.hbm [resolvable:$true] %s211
          %s213 = sshll.u32 %s205, 4
          %s214 = int_to_ptr.vmem [resolvable:$true] %s213
          %216 = dma.hbm_to_vmem [thread:$0]  %s212, 128, %s214, %s202
        $region32: #{tpu_custom_call.1} parent=27 // pred_fallthru
          _
        // Predicated region
        $region33: #{tpu_custom_call.1} parent=27 // pred_check
          %p217 = pneg %p66
        $region34: #{tpu_custom_call.1} parent=27 // pred_check_branch
          %219 = sbr.rel (%p217) target = $region36
        $region35: #{tpu_custom_call.1} parent=27 // pred_region
          %s220 = sand.u32 %s20, 1
          %s221 = scalar_lea.sflag [#allocation6], %s220
          %s222 = sand.u32 %s56, 1
          %s223 = smul.addr %s222, 8
          %s224 = scalar_lea.vmem [#allocation5], %s223
          %226 = vsyncadd %s221, 0
          %s227 = smul.addr %s20, 8
          %s228 = scalar_lea.hbm %s1, %s227
          %s230 = sshll.u32 %s228, 4
          %s231 = int_to_ptr.hbm [resolvable:$true] %s230
          %s232 = sshll.u32 %s224, 4
          %s233 = int_to_ptr.vmem [resolvable:$true] %s232
          %235 = dma.hbm_to_vmem [thread:$0]  %s231, 128, %s233, %s221
        $region36: #{tpu_custom_call.1} parent=27 // pred_fallthru
          _
      $region28: #{tpu_custom_call.1} parent=5 // pred_fallthru
        _
      %p236 = scmp.le.s32.totalorder 1, %s20
      %p237 = scmp.lt.s32.totalorder %s20, 3
      %p238 = pnand %p236, %p237
      %p239 = pneg %p238
      // Predicated region
      $region37: #{tpu_custom_call.1} parent=5 // pred_check
        _
      $region38: #{tpu_custom_call.1} parent=5 // pred_check_branch
        %241 = sbr.rel (%p238) target = $region40
      $region39: #{tpu_custom_call.1} parent=5 // pred_region
        %s242 = ssub.s32 %s20, 1
        %s243 = sand.u32 %s33, 1
        %s244 = scalar_lea.sflag [#allocation3], %s243
        %s245 = sand.u32 %s33, 1
        %s246 = smul.addr %s245, 8
        %s247 = scalar_lea.vmem [#allocation2], %s246
        // Predicated region
        $region41: #{tpu_custom_call.1} parent=39 // pred_check
          %p248 = pneg %p46
        $region42: #{tpu_custom_call.1} parent=39 // pred_check_branch
          %250 = sbr.rel (%p248) target = $region44
        $region43: #{tpu_custom_call.1} parent=39 // pred_region
          %252 = dma.done %s244, 128
        $region44: #{tpu_custom_call.1} parent=39 // pred_fallthru
          _
        %s253 = sand.u32 %s25, 1
        %s254 = scalar_lea.sflag [#allocation6], %s253
        %s255 = sand.u32 %s59, 1
        %s256 = smul.addr %s255, 8
        %s257 = scalar_lea.vmem [#allocation5], %s256
        // Predicated region
        $region45: #{tpu_custom_call.1} parent=39 // pred_check
          %p258 = pneg %p72
        $region46: #{tpu_custom_call.1} parent=39 // pred_check_branch
          %260 = sbr.rel (%p258) target = $region48
        $region47: #{tpu_custom_call.1} parent=39 // pred_region
          %262 = dma.done %s254, 128
        $region48: #{tpu_custom_call.1} parent=39 // pred_fallthru
          _
        // Predicated region
        $region49: #{tpu_custom_call.1} parent=39 // pred_check
          %p263 = pneg %p93
        $region50: #{tpu_custom_call.1} parent=39 // pred_check_branch
          %265 = sbr.rel (%p263) target = $region52
        $region51: #{tpu_custom_call.1} parent=39 // pred_region
          %267 = dma.done [#allocation6], 128
        $region52: #{tpu_custom_call.1} parent=39 // pred_fallthru
          _
        %s268 = sand.u32 %s33, 1
        %s269 = scalar_lea.sflag [#allocation3], %s268
        %s270 = sand.u32 %s33, 1
        %s271 = smul.addr %s270, 8
        %s272 = scalar_lea.vmem [#allocation2], %s271
        %p273 = pneg %p46
        %p274 = pneg %p43
        %s275 = sand.u32 %s25, 1
        %s276 = scalar_lea.sflag [#allocation6], %s275
        %s277 = sand.u32 %s59, 1
        %s278 = smul.addr %s277, 8
        %s279 = scalar_lea.vmem [#allocation5], %s278
        %p280 = pneg %p72
        %p281 = pneg %p69
        %p282 = pneg %p93
        %p283 = pneg %p90
        %p284 = pneg %p114
        %p285 = pneg %p111
        %p286 = pneg %p135
        %p287 = pneg %p132
        %p288 = pneg %p161
        %p289 = pneg %p158
        %s290 = sand.u32 %s148, 1
        %s291 = scalar_lea.sflag [#allocation4], %s290
        %s292 = sand.u32 %s148, 1
        %s293 = smul.addr %s292, 8
        %s294 = scalar_lea.vmem [#allocation8], %s293
        %v295 = vld [vmem:[%s247] sm:$0xff]
        %v296 = vld [vmem:[%s257] sm:$0xff]
        %v297 = vadd.f32 %v295, %v296
        %v298 = vld [vmem:[#allocation7] sm:$0xff]
        %v299 = vadd.f32 %v297, %v298
        %v300 = vld [vmem:[%s3] sm:$0x1]
        %v301 = vld [vmem:[%s4] sm:$0x1]
        %vm302 = vcmask 261120
        %v303 = vsel %vm302, %v299, 0.0
        %304 = vadd.xlane.f32.xlu0 %v303
        %v305 = vpop.xlane.xlu0 %304
        %v306 = vrcp.pop 32.0
        %v307 = vmul.f32 32.0, %v306
        %v308 = vsub.f32 1.0, %v307
        %v309 = vmul.f32 %v306, %v308
        %v310 = vadd.f32 %v306, %v309
        %vm311 = vweird.f32 %v306
        %v312 = vsel %vm311, %v306, %v310
        %v313 = vmul.f32 %v305, %v312
        %v314 = vsub.f32 %v299, %v313
        %v315 = vmul.f32 %v314, %v314
        %v316 = vsel %vm302, %v315, 0.0
        %317 = vadd.xlane.f32.xlu0 %v316
        %v318 = vpop.xlane.xlu0 %317
        %v319 = vmul.f32 %v318, %v312
        %v320 = vadd.f32 %v319, 1e-12
        %v321 = vrsqrt.pop %v320
        %v322 = vmul.f32 %v321, %v320
        %v323 = vmul.f32 %v322, %v321
        %v324 = vmul.f32 0.5, %v323
        %v325 = vsub.f32 1.5, %v324
        %v326 = vmul.f32 %v321, %v325
        %vm327 = vweird.f32 %v320
        %vm328 = vweird.f32 %v321
        %vm329 = vmor %vm327, %vm328
        %v330 = vsel %vm329, %v321, %v326
        %v331 = vmul.f32 %v314, %v330
        %v333 = vperm.slane %v300, 0
        %v335 = vmul.f32 %v331, %v333
        %v337 = vperm.slane %v301, 0
        %v339 = vadd.f32 %v335, %v337
        %340 = vst.msk [vmem:[%s294] sm:$0xff] %vm302, %v339
        %s341 = sand.u32 %s148, 1
        %s342 = scalar_lea.sflag [#allocation4], %s341
        %s343 = sand.u32 %s148, 1
        %s344 = smul.addr %s343, 8
        %s345 = scalar_lea.vmem [#allocation8], %s344
        // Predicated region
        $region53: #{tpu_custom_call.1} parent=39 // pred_check
          %p346 = pneg %p158
        $region54: #{tpu_custom_call.1} parent=39 // pred_check_branch
          %348 = sbr.rel (%p346) target = $region56
        $region55: #{tpu_custom_call.1} parent=39 // pred_region
          %350 = vsyncadd %s342, 0
          %s351 = smul.addr %s25, 8
          %s352 = scalar_lea.hbm %s5, %s351
          %s354 = sshll.u32 %s345, 4
          %s355 = int_to_ptr.vmem [resolvable:$true] %s354
          %s356 = sshll.u32 %s352, 4
          %s357 = int_to_ptr.hbm [resolvable:$true] %s356
          %359 = dma.vmem_to_hbm [thread:$0]  %s355, 128, %s357, %s342
        $region56: #{tpu_custom_call.1} parent=39 // pred_fallthru
          _
      $region40: #{tpu_custom_call.1} parent=5 // pred_fallthru
        _
      %p360 = scmp.le.s32.totalorder 2, %s20
      // Predicated region
      $region57: #{tpu_custom_call.1} parent=5 // pred_check
        %p361 = pneg %p360
      $region58: #{tpu_custom_call.1} parent=5 // pred_check_branch
        %363 = sbr.rel (%p361) target = $region60
      $region59: #{tpu_custom_call.1} parent=5 // pred_region
        %s364 = ssub.s32 %s20, 2
        // Predicated region
        $region61: #{tpu_custom_call.1} parent=59 // pred_check
          %p365 = pneg %p164
        $region62: #{tpu_custom_call.1} parent=59 // pred_check_branch
          %367 = sbr.rel (%p365) target = $region64
        $region63: #{tpu_custom_call.1} parent=59 // pred_region
          %s368 = sand.u32 %s149, 1
          %s369 = scalar_lea.sflag [#allocation4], %s368
          %s370 = sand.u32 %s149, 1
          %s371 = smul.addr %s370, 8
          %s372 = scalar_lea.vmem [#allocation8], %s371
          %374 = dma.done %s369, 128
        $region64: #{tpu_custom_call.1} parent=59 // pred_fallthru
          _
      $region60: #{tpu_custom_call.1} parent=5 // pred_fallthru
        _
    $region6: #{tpu_custom_call.1} parent=1 // loop_footer
      %s24 = sadd.s32 1, %s20
    $region7: #{tpu_custom_call.1} parent=1 // loop_footer_branch
      %19 = sbr.rel target = $region3
    $region8: #{tpu_custom_call.1} parent=1 // loop_exit
      _
    %375 = vsyncpa [#allocation3], 1
    %s376 = scalar_lea.sflag [#allocation3], 1
    %377 = vsyncpa %s376, 1
    %378 = vsyncpa [#allocation6], 1
    %s379 = scalar_lea.sflag [#allocation6], 1
    %380 = vsyncpa %s379, 1
    %381 = vsyncpa [#allocation4], 1
    %s382 = scalar_lea.sflag [#allocation4], 1
    %383 = vsyncpa %s382, 1

</llo_original>
